<compile_context>
chip_gen: v7x
topology: tpu7x:2x2x1
jax: 0.10.0
libtpu: 0.0.40
codegen_flags: <defaults>
</compile_context>

<pallas_src>
import functools

import jax
import jax.numpy as jnp
from jax.experimental import pallas as pl
from jax.experimental.pallas import tpu as pltpu


def _pad_kernel(x_ref, o_ref, *, pad_len, direction):
    p = pad_len
    B, H, W = x_ref.shape
    Hp, Wp = H + 2 * p, W + 2 * p
    x = x_ref[...]                                   # (B, H, W) tile

    # ---- middle band: output rows [p, p+H) ---------------------------------
    # interior (the bulk of the bytes — one dense copy, no temporaries)
    o_ref[:, p:p + H, p:p + W] = x
    # W halos: thin strips, O(p/W) of the traffic
    if direction in ("both", "horizontal"):
        o_ref[:, p:p + H, 0:p] = x[:, :, W - p:W]          # left  <- right edge
        o_ref[:, p:p + H, p + W:Wp] = x[:, :, 0:p]         # right <- left edge
    else:  # 'vertical', 'none': constant (zero) W halos
        zcol = jnp.zeros((B, H, p), x.dtype)
        o_ref[:, p:p + H, 0:p] = zcol
        o_ref[:, p:p + H, p + W:Wp] = zcol

    # ---- top / bottom rows: [0, p) and [p+H, Hp) ----------------------------
    if direction in ("both", "vertical"):
        # circular: copy from the already-filled middle band (includes the W
        # halos, which matches torch's op ordering for both directions).
        o_ref[:, 0:p, :] = o_ref[:, H:H + p, :]
        o_ref[:, p + H:Hp, :] = o_ref[:, p:2 * p, :]
    else:  # 'horizontal', 'none': constant zeros across the full width
        zrow = jnp.zeros((B, p, Wp), x.dtype)
        o_ref[:, 0:p, :] = zrow
        o_ref[:, p + H:Hp, :] = zrow


def _roundup(a, m):
    return -(-a // m) * m


def _pick_block_batch(nc, H, W, Hp, Wp, itemsize):
    """How many (H, W) slices per grid step.  Returns a divisor of nc."""
    # Physical VMEM footprint per slice: last dim padded to 128 lanes,
    # second-to-last to the dtype's sublane multiple (8 for f32, 16 bf16, ...).
    sub = max(8, 32 // itemsize)
    lane = 128
    in_b = _roundup(H, sub) * _roundup(W, lane) * itemsize
    out_b = _roundup(Hp, sub) * _roundup(Wp, lane) * itemsize

    # ~4 MiB of (padded) input per step amortizes the ~0.35 us/step overhead;
    # keep double-buffered input+output blocks well under the explicit
    # vmem_limit_bytes set below (48 MiB) with headroom.
    target_in = 4 * 1024 * 1024
    vmem_budget = 24 * 1024 * 1024
    b_target = max(1, target_in // in_b)
    b_vmem = max(1, vmem_budget // (2 * (in_b + out_b)))
    b_cap = max(1, min(b_target, b_vmem, nc))

    # Prefer >= 4 grid steps when possible so the 'parallel' grid axis splits
    # evenly across v7x's two TensorCores (no-op on single-TC v5e/v6e).
    if nc >= 4:
        b_cap = max(1, min(b_cap, nc // 4))

    # Largest divisor of nc that is <= b_cap  -> no remainder block, no
    # wrapper-side padding/slicing of the folded batch axis.
    best = 1
    d = 1
    while d * d <= nc:
        if nc % d == 0:
            if d <= b_cap:
                best = max(best, d)
            q = nc // d
            if q <= b_cap:
                best = max(best, q)
        d += 1
    return best


def padding_circular(x, kernel_size, direction="both", force_pallas=False):
    """x: (N, C, H, W) -> (N, C, H + 2p, W + 2p) with p = kernel_size // 2."""
    pad_len = kernel_size // 2
    if pad_len == 0:
        return x
    if direction not in ("both", "horizontal", "vertical", "none"):
        raise ValueError(f"unknown direction: {direction!r}")
    N, C, H, W = x.shape
    if direction in ("both", "vertical") and pad_len > H:
        raise ValueError("circular pad_len larger than H (torch would raise)")
    if direction in ("both", "horizontal") and pad_len > W:
        raise ValueError("circular pad_len larger than W (torch would raise)")

    Hp, Wp = H + 2 * pad_len, W + 2 * pad_len
    NC = N * C
    itemsize = jnp.dtype(x.dtype).itemsize

    # Small-input fast path: XLA's fused pad beats the Pallas launch overhead.
    if not force_pallas and x.size * itemsize < 256 * 1024:
        return _reference(x, kernel_size, direction)

    B = _pick_block_batch(NC, H, W, Hp, Wp, itemsize)
    grid = NC // B                                     # exact — B divides NC

    xf = x.reshape(NC, H, W)
    kern = functools.partial(_pad_kernel, pad_len=pad_len, direction=direction)

    out = pl.pallas_call(
        kern,
        out_shape=jax.ShapeDtypeStruct((NC, Hp, Wp), x.dtype),
        grid=(grid,),
        in_specs=[pl.BlockSpec((B, H, W), lambda i: (i, 0, 0))],
        out_specs=pl.BlockSpec((B, Hp, Wp), lambda i: (i, 0, 0)),
        compiler_params=pltpu.CompilerParams(
            dimension_semantics=("parallel",),
            vmem_limit_bytes=48 * 1024 * 1024,
        ),
    )(xf)

    return out.reshape(N, C, Hp, Wp)


def _reference(x, kernel_size, direction):
    """Pure-JAX reference mirroring torch.nn.functional.pad semantics."""
    p = kernel_size // 2
    nopad = ((0, 0), (0, 0))
    if direction == "both":
        return jnp.pad(x, nopad + ((p, p), (p, p)), mode="wrap")
    if direction == "horizontal":
        r = jnp.pad(x, nopad + ((0, 0), (p, p)), mode="wrap")
        return jnp.pad(r, nopad + ((p, p), (0, 0)), mode="constant")
    if direction == "vertical":
        r = jnp.pad(x, nopad + ((p, p), (0, 0)), mode="wrap")
        return jnp.pad(r, nopad + ((0, 0), (p, p)), mode="constant")
    # "none"
    return jnp.pad(x, nopad + ((p, p), (p, p)), mode="constant")


if __name__ == "__main__":
    key = jax.random.PRNGKey(0)

    ok = True
    # (shape, kernel_size): module-sized case, a folded-batch size that is not
    # a multiple of 4 (exercises the divisor picker), and a larger pad.
    cases = (
        ((2, 4, 16, 16), 3),
        ((1, 5, 16, 16), 3),
        ((2, 4, 16, 16), 5),
    )
    for shape, ks in cases:
        x = jax.random.normal(key, shape, dtype=jnp.float32)
        for direction in ("both", "horizontal", "vertical", "none"):
            out = padding_circular(x, ks, direction, force_pallas=True)
            out = jax.block_until_ready(out)
            ref = _reference(x, ks, direction)
            if out.shape != ref.shape or not jnp.array_equal(out, ref):
                ok = False
                print(f"MISMATCH for shape={shape} ks={ks} direction={direction}")

    if ok:
        print("KERNEL_OK")
</pallas_src>

<mosaic_0001>
module attributes {stable_mosaic.version = 11 : i64} {
  func.func @_pad_kernel(%arg0: i32, %arg1: memref<2x16x16xf32, #tpu.memory_space<vmem>>, %arg2: memref<2x18x18xf32, #tpu.memory_space<vmem>>) attributes {dimension_semantics = [#tpu.dimension_semantics<parallel>], iteration_bounds = array<i64: 4>, scalar_prefetch = 0 : i64, scratch_operands = 0 : i64, tpu.core_type = #tpu.core_type<tc>, window_params = [{transform_indices = @transform_0, window_bounds = array<i64: 2, 16, 16>}, {transform_indices = @transform_1, window_bounds = array<i64: 2, 18, 18>}]} {
    %c0 = arith.constant 0 : index
    %c0_0 = arith.constant 0 : index
    %c0_1 = arith.constant 0 : index
    %0 = vector.load %arg1[%c0, %c0_0, %c0_1] : memref<2x16x16xf32, #tpu.memory_space<vmem>>, vector<2x16x16xf32>
    %c0_2 = arith.constant 0 : index
    %c1 = arith.constant 1 : index
    %c1_3 = arith.constant 1 : index
    %1 = vector.load %arg2[%c0_2, %c1, %c1_3] : memref<2x18x18xf32, #tpu.memory_space<vmem>>, vector<2x16x16xf32>
    tpu.vector_store %arg2[%c0_2, %c1, %c1_3], %0 {strides = array<i32>} : memref<2x18x18xf32, #tpu.memory_space<vmem>>, vector<2x16x16xf32>,
    %2 = vector.extract_strided_slice %0 {offsets = [0, 0, 15], sizes = [2, 16, 1], strides = [1, 1, 1]} : vector<2x16x16xf32> to vector<2x16x1xf32>
    %c0_4 = arith.constant 0 : index
    %c1_5 = arith.constant 1 : index
    %c0_6 = arith.constant 0 : index
    %3 = vector.load %arg2[%c0_4, %c1_5, %c0_6] : memref<2x18x18xf32, #tpu.memory_space<vmem>>, vector<2x16x1xf32>
    tpu.vector_store %arg2[%c0_4, %c1_5, %c0_6], %2 {strides = array<i32>} : memref<2x18x18xf32, #tpu.memory_space<vmem>>, vector<2x16x1xf32>,
    %4 = vector.extract_strided_slice %0 {offsets = [0, 0, 0], sizes = [2, 16, 1], strides = [1, 1, 1]} : vector<2x16x16xf32> to vector<2x16x1xf32>
    %c0_7 = arith.constant 0 : index
    %c1_8 = arith.constant 1 : index
    %c17 = arith.constant 17 : index
    %5 = vector.load %arg2[%c0_7, %c1_8, %c17] : memref<2x18x18xf32, #tpu.memory_space<vmem>>, vector<2x16x1xf32>
    tpu.vector_store %arg2[%c0_7, %c1_8, %c17], %4 {strides = array<i32>} : memref<2x18x18xf32, #tpu.memory_space<vmem>>, vector<2x16x1xf32>,
    %c0_9 = arith.constant 0 : index
    %c16 = arith.constant 16 : index
    %c0_10 = arith.constant 0 : index
    %6 = vector.load %arg2[%c0_9, %c16, %c0_10] : memref<2x18x18xf32, #tpu.memory_space<vmem>>, vector<2x1x18xf32>
    %c0_11 = arith.constant 0 : index
    %c0_12 = arith.constant 0 : index
    %c0_13 = arith.constant 0 : index
    %7 = vector.load %arg2[%c0_11, %c0_12, %c0_13] : memref<2x18x18xf32, #tpu.memory_space<vmem>>, vector<2x1x18xf32>
    tpu.vector_store %arg2[%c0_11, %c0_12, %c0_13], %6 {strides = array<i32>} : memref<2x18x18xf32, #tpu.memory_space<vmem>>, vector<2x1x18xf32>,
    %c0_14 = arith.constant 0 : index
    %c1_15 = arith.constant 1 : index
    %c0_16 = arith.constant 0 : index
    %8 = vector.load %arg2[%c0_14, %c1_15, %c0_16] : memref<2x18x18xf32, #tpu.memory_space<vmem>>, vector<2x1x18xf32>
    %c0_17 = arith.constant 0 : index
    %c17_18 = arith.constant 17 : index
    %c0_19 = arith.constant 0 : index
    %9 = vector.load %arg2[%c0_17, %c17_18, %c0_19] : memref<2x18x18xf32, #tpu.memory_space<vmem>>, vector<2x1x18xf32>
    tpu.vector_store %arg2[%c0_17, %c17_18, %c0_19], %8 {strides = array<i32>} : memref<2x18x18xf32, #tpu.memory_space<vmem>>, vector<2x1x18xf32>,
    return
  }
  func.func @transform_0(%arg0: i32) -> (i32, i32, i32) {
    %c0_i32 = arith.constant 0 : i32
    %c0_i32_0 = arith.constant 0 : i32
    %c0_i32_1 = arith.constant 0 : i32
    return %arg0, %c0_i32, %c0_i32_0 : i32, i32, i32
  }
  func.func @transform_1(%arg0: i32) -> (i32, i32, i32) {
    %c0_i32 = arith.constant 0 : i32
    %c0_i32_0 = arith.constant 0 : i32
    %c0_i32_1 = arith.constant 0 : i32
    return %arg0, %c0_i32, %c0_i32_0 : i32, i32, i32
  }
}

</mosaic_0001>

<llo_original>
// kernel: tpu_custom_call.1
$region0: #{tpu_custom_call.1}
  #allocation0 [shape = 'u32[]', space=smem, size = 0x4, offset = 0x4, fixed_abs, tag = 'smem constant byte address 0x4 - core index']
  #allocation1 [shape = 'u32[144,128]{1,0:T(1,128)}', space=vmem, size = 0x12000, scoped, tag = 'internal scratch']
  %s0 = inlined_call_operand.hbm [shape: f32[8,16,16], index: 0, kind: input, shape index: {}]
  %s1 = inlined_call_operand.vmem [shape: f32[8,18,18], index: 1, kind: output, shape index: {}]
  %s2 = sld [smem:[#allocation0]]
  $region41: #{tpu_custom_call.1} parent=0
    _
  %s4 = ssub.s32 1, %s2
  %s5 = scalar_select 0, %s4, %s2
  $region1: #{tpu_custom_call.1} parent=0
    #allocation2 [shape = 'u8[32768]{0}', space=vmem, size = 0x8000, scoped, tag = 'input window, operand 0']
    #allocation3 [shape = 's32[2]{0}', space=sflag, size = 0x8, scoped, tag = 'scoped memory for tpu_custom_call.1']
    %6 = vsyncpa [#allocation3], 0
    %s7 = scalar_lea.sflag [#allocation3], 1
    %8 = vsyncpa %s7, 0
    loop: start=0, step=1, limit=6
    $region2: #{tpu_custom_call.1} parent=1 // loop_pre_header
      _
    $region3: #{tpu_custom_call.1} parent=1 // loop_header
      %s10 = sphi 0, %s14
      %p11 = scmp.ge.s32.totalorder %s10, 6
      %s20 = sphi 0, %s22
      %s23 = sphi 0, %s20
      %s24 = sphi 0, %s23
      %s40 = sphi 0, %s24
      %s46 = sphi 0, %s48
      %s49 = sphi 0, %s46
      %s50 = sphi 0, %s49
      %s66 = sphi 0, %s50
    $region4: #{tpu_custom_call.1} parent=1 // loop_header_branch
      %13 = sbr.rel (%p11) target = $region8
    $region5: #{tpu_custom_call.1} parent=1 // loop_body
      %s15 = ssub.s32 %s10, 1
      %s16 = ssub.s32 %s10, 2
      %s17 = sadd.s32 %s10, 1
      %s18 = ssub.s32 %s10, %s17
      %p19 = scmp.eq.s32.totalorder %s18, 0
      %s21 = sadd.s32 %s20, 1
      %s22 = scalar_select %p19, %s20, %s21
      %p25 = pneg %p19
      %p26 = scmp.eq.s32.totalorder %s10, 3
      %p27 = por %p25, %p26
      %p28 = scmp.ne.s32.totalorder %s20, %s23
      %p29 = scmp.eq.s32.totalorder %s10, 0
      %p30 = por %p28, %p29
      %p31 = scmp.ne.s32.totalorder %s20, %s23
      %p32 = scmp.eq.s32.totalorder %s15, 3
      %p33 = por %p31, %p32
      %p34 = scmp.ne.s32.totalorder %s23, %s24
      %p35 = scmp.eq.s32.totalorder %s15, 0
      %p36 = por %p34, %p35
      %p37 = scmp.ne.s32.totalorder %s23, %s24
      %p38 = scmp.eq.s32.totalorder %s16, 3
      %p39 = por %p37, %p38
      %p41 = scmp.ne.s32.totalorder %s24, %s40
      %p42 = scmp.eq.s32.totalorder %s16, 0
      %p43 = por %p41, %p42
      %s44 = ssub.s32 %s10, %s17
      %p45 = scmp.eq.s32.totalorder %s44, 0
      %s47 = sadd.s32 %s46, 1
      %s48 = scalar_select %p45, %s46, %s47
      %p51 = pneg %p45
      %p52 = scmp.eq.s32.totalorder %s10, 3
      %p53 = por %p51, %p52
      %p54 = scmp.ne.s32.totalorder %s46, %s49
      %p55 = scmp.eq.s32.totalorder %s10, 0
      %p56 = por %p54, %p55
      %p57 = scmp.ne.s32.totalorder %s46, %s49
      %p58 = scmp.eq.s32.totalorder %s15, 3
      %p59 = por %p57, %p58
      %p60 = scmp.ne.s32.totalorder %s49, %s50
      %p61 = scmp.eq.s32.totalorder %s15, 0
      %p62 = por %p60, %p61
      %p63 = scmp.ne.s32.totalorder %s49, %s50
      %p64 = scmp.eq.s32.totalorder %s16, 3
      %p65 = por %p63, %p64
      %p67 = scmp.ne.s32.totalorder %s50, %s66
      %p68 = scmp.eq.s32.totalorder %s16, 0
      %p69 = por %p67, %p68
      %p70 = scmp.le.s32.totalorder 1, %s10
      %p71 = scmp.lt.s32.totalorder %s10, 5
      %p72 = pnand %p70, %p71
      %p73 = pneg %p72
      // Predicated region
      $region9: #{tpu_custom_call.1} parent=5 // pred_check
        _
      $region10: #{tpu_custom_call.1} parent=5 // pred_check_branch
        %75 = sbr.rel (%p72) target = $region12
      $region11: #{tpu_custom_call.1} parent=5 // pred_region
        %s76 = ssub.s32 %s10, 1
      $region12: #{tpu_custom_call.1} parent=5 // pred_fallthru
        _
      %p77 = scmp.lt.s32.totalorder %s10, 4
      // Predicated region
      $region13: #{tpu_custom_call.1} parent=5 // pred_check
        %p78 = pneg %p77
      $region14: #{tpu_custom_call.1} parent=5 // pred_check_branch
        %80 = sbr.rel (%p78) target = $region16
      $region15: #{tpu_custom_call.1} parent=5 // pred_region
        // Predicated region
        $region17: #{tpu_custom_call.1} parent=15 // pred_check
          %p81 = pneg %p30
        $region18: #{tpu_custom_call.1} parent=15 // pred_check_branch
          %83 = sbr.rel (%p81) target = $region20
        $region19: #{tpu_custom_call.1} parent=15 // pred_region
          %s84 = sand.u32 %s20, 1
          %s85 = scalar_lea.sflag [#allocation3], %s84
          %s86 = sand.u32 %s20, 1
          %s87 = smul.addr %s86, 32
          %s88 = scalar_lea.vmem [#allocation2], %s87
          %s89 = smul.u32 2, %s10
          %s91 = ssub.s32 512, 512
          %92 = vsyncadd %s85, %s91
          %s93 = smul.addr %s89, 2
          %s94 = smul.addr %s93, 128
          %s95 = scalar_lea.hbm %s0, %s94
          %s96 = sshll.u32 %s88, 4
          %s97 = int_to_ptr.vmem [resolvable:$true] %s96
          %102 = dma.hbm_to_vmem [thread:$0]  %s95, 512, %s97, %s85, 128, 128, 8
        $region20: #{tpu_custom_call.1} parent=15 // pred_fallthru
          _
      $region16: #{tpu_custom_call.1} parent=5 // pred_fallthru
        _
      %p103 = scmp.le.s32.totalorder 1, %s10
      %p104 = scmp.lt.s32.totalorder %s10, 5
      %p105 = pnand %p103, %p104
      %p106 = pneg %p105
      // Predicated region
      $region21: #{tpu_custom_call.1} parent=5 // pred_check
        _
      $region22: #{tpu_custom_call.1} parent=5 // pred_check_branch
        %108 = sbr.rel (%p105) target = $region24
      $region23: #{tpu_custom_call.1} parent=5 // pred_region
        %s109 = ssub.s32 %s10, 1
        %s110 = sand.u32 %s23, 1
        %s111 = scalar_lea.sflag [#allocation3], %s110
        %s112 = sand.u32 %s23, 1
        %s113 = smul.addr %s112, 32
        %s114 = scalar_lea.vmem [#allocation2], %s113
        // Predicated region
        $region25: #{tpu_custom_call.1} parent=23 // pred_check
          %p115 = pneg %p36
        $region26: #{tpu_custom_call.1} parent=23 // pred_check_branch
          %117 = sbr.rel (%p115) target = $region28
        $region27: #{tpu_custom_call.1} parent=23 // pred_region
          %118 = dma.done %s111, 512
        $region28: #{tpu_custom_call.1} parent=23 // pred_fallthru
          _
        %s119 = sand.u32 %s23, 1
        %s120 = scalar_lea.sflag [#allocation3], %s119
        %s121 = sand.u32 %s23, 1
        %s122 = smul.addr %s121, 32
        %s123 = scalar_lea.vmem [#allocation2], %s122
        %p124 = pneg %p36
        %p125 = pneg %p33
        %p126 = pneg %p62
        %p127 = pneg %p59
        %s128 = smul.u32 2, %s15
        %p129 = scmp.lt.s32.totalorder %s128, 7
        %s130 = scalar_select %p129, %s128, 7
        %s131 = smul.addr %s130, 3
        %s132 = smul.addr %s131, 8
        %s133 = scalar_lea.vmem %s1, %s132
        %s134 = smul.u32 2, %s15
        %s135 = smul.u32 2, %s15
        %p136 = scmp.lt.s32.totalorder %s135, 7
        %s137 = scalar_select %p136, %s135, 7
        %s138 = smul.addr %s137, 3
        %s139 = smul.addr %s138, 8
        %s140 = scalar_lea.vmem %s1, %s139
        %s141 = smul.u32 2, %s15
        %v142 = vld [vmem:[%s114] sm:$0xff]
        %v143 = vld [vmem:[%s114 + $0x8] sm:$0xff]
        %v144 = vld [vmem:[%s114 + $0x10] sm:$0xff]
        %v145 = vld [vmem:[%s114 + $0x18] sm:$0xff]
        %150 = vrot.lane.b32.xlu0 %v142, 1
        %v151 = vpop.permute.xlu0 %150
        %152 = vrot.lane.b32.xlu0 %v143, 1
        %v153 = vpop.permute.xlu0 %152
        %154 = vrot.lane.b32.xlu0 %v144, 1
        %v155 = vpop.permute.xlu0 %154
        %156 = vrot.lane.b32.xlu0 %v145, 1
        %v157 = vpop.permute.xlu0 %156
        %vm162 = vcmask 138248
        %163 = vst.msk [vmem:[%s140 + $0x1] sm:$0xff] %vm162, %v151
        %164 = vst.msk [vmem:[%s140 + $0x9] sm:$0xff] %vm162, %v153
        %165 = vst.msk [vmem:[%s140 + $0x19] sm:$0xff] %vm162, %v155
        %166 = vst.msk [vmem:[%s140 + $0x21] sm:$0xff] %vm162, %v157
        %167 = vrot.lane.b32.xlu0 %v142, 113
        %v168 = vpop.permute.xlu0 %167
        %169 = vrot.lane.b32.xlu0 %v143, 113
        %v170 = vpop.permute.xlu0 %169
        %171 = vrot.lane.b32.xlu0 %v144, 113
        %v172 = vpop.permute.xlu0 %171
        %173 = vrot.lane.b32.xlu0 %v145, 113
        %v174 = vpop.permute.xlu0 %173
        %vm179 = vcmask 7168
        %180 = vst.msk [vmem:[%s140 + $0x1] sm:$0xff] %vm179, %v168
        %181 = vst.msk [vmem:[%s140 + $0x9] sm:$0xff] %vm179, %v170
        %182 = vst.msk [vmem:[%s140 + $0x19] sm:$0xff] %vm179, %v172
        %183 = vst.msk [vmem:[%s140 + $0x21] sm:$0xff] %vm179, %v174
        %184 = vrot.lane.b32.xlu0 %v142, 17
        %v185 = vpop.permute.xlu0 %184
        %186 = vrot.lane.b32.xlu0 %v143, 17
        %v187 = vpop.permute.xlu0 %186
        %188 = vrot.lane.b32.xlu0 %v144, 17
        %v189 = vpop.permute.xlu0 %188
        %190 = vrot.lane.b32.xlu0 %v145, 17
        %v191 = vpop.permute.xlu0 %190
        %vm196 = vcmask 146568
        %197 = vst.msk [vmem:[%s140 + $0x1] sm:$0xff] %vm196, %v185
        %198 = vst.msk [vmem:[%s140 + $0x9] sm:$0xff] %vm196, %v187
        %199 = vst.msk [vmem:[%s140 + $0x19] sm:$0xff] %vm196, %v189
        %200 = vst.msk [vmem:[%s140 + $0x21] sm:$0xff] %vm196, %v191
        %v201 = vld [vmem:[%s140 + $0x10] sm:$0x1]
        %v202 = vld [vmem:[%s140 + $0x28] sm:$0x1]
        %vm203 = vcmask 139264
        %204 = vst.msk [vmem:[%s140] sm:$0x1] %vm203, %v201
        %205 = vst.msk [vmem:[%s140 + $0x18] sm:$0x1] %vm203, %v202
        %v206 = vld [vmem:[%s140 + $0x1] sm:$0x1]
        %v207 = vld [vmem:[%s140 + $0x19] sm:$0x1]
        %208 = vst.msk [vmem:[%s140 + $0x11] sm:$0x1] %vm203, %v206
        %209 = vst.msk [vmem:[%s140 + $0x29] sm:$0x1] %vm203, %v207
        %s210 = smul.u32 2, %s15
        %p211 = scmp.lt.s32.totalorder %s210, 7
        %s212 = scalar_select %p211, %s210, 7
        %s213 = smul.addr %s212, 3
        %s214 = smul.addr %s213, 8
        %s215 = scalar_lea.vmem %s1, %s214
        // Predicated region
        $region29: #{tpu_custom_call.1} parent=23 // pred_check
          %p216 = pneg %p59
        $region30: #{tpu_custom_call.1} parent=23 // pred_check_branch
          %218 = sbr.rel (%p216) target = $region32
        $region31: #{tpu_custom_call.1} parent=23 // pred_region
          %s219 = smul.u32 2, %s15
        $region32: #{tpu_custom_call.1} parent=23 // pred_fallthru
          _
      $region24: #{tpu_custom_call.1} parent=5 // pred_fallthru
        _
      %p220 = scmp.le.s32.totalorder 2, %s10
      // Predicated region
      $region33: #{tpu_custom_call.1} parent=5 // pred_check
        %p221 = pneg %p220
      $region34: #{tpu_custom_call.1} parent=5 // pred_check_branch
        %223 = sbr.rel (%p221) target = $region36
      $region35: #{tpu_custom_call.1} parent=5 // pred_region
        %s224 = ssub.s32 %s10, 2
        // Predicated region
        $region37: #{tpu_custom_call.1} parent=35 // pred_check
          %p225 = pneg %p65
        $region38: #{tpu_custom_call.1} parent=35 // pred_check_branch
          %227 = sbr.rel (%p225) target = $region40
        $region39: #{tpu_custom_call.1} parent=35 // pred_region
          %s228 = smul.u32 2, %s16
          %p229 = scmp.lt.s32.totalorder %s228, 7
          %s230 = scalar_select %p229, %s228, 7
          %s231 = smul.addr %s230, 3
          %s232 = smul.addr %s231, 8
          %s233 = scalar_lea.vmem %s1, %s232
        $region40: #{tpu_custom_call.1} parent=35 // pred_fallthru
          _
      $region36: #{tpu_custom_call.1} parent=5 // pred_fallthru
        _
    $region6: #{tpu_custom_call.1} parent=1 // loop_footer
      %s14 = sadd.s32 1, %s10
    $region7: #{tpu_custom_call.1} parent=1 // loop_footer_branch
      %9 = sbr.rel target = $region3
    $region8: #{tpu_custom_call.1} parent=1 // loop_exit
      _
    %234 = vsyncpa [#allocation3], 1
    %s235 = scalar_lea.sflag [#allocation3], 1
    %236 = vsyncpa %s235, 1

</llo_original>
